<compile_context>
chip_gen: v6e
topology: v6e:2x2x1
jax: 0.10.0
libtpu: 0.0.40
codegen_flags: <defaults>
</compile_context>

<pallas_src>
import functools

import jax
import jax.numpy as jnp
from jax import lax
from jax.experimental import pallas as pl
from jax.experimental.pallas import tpu as pltpu


def mlp_kernel(x_ref, w1_ref, b14_ref, w234_ref, w5_ref, b5_ref, o_ref,
               *, chunk, use_bf16):
    # x: (D_in, block_n) -- batch on the lane axis.
    d_in = x_ref.shape[0]
    block_n = x_ref.shape[1]
    n_chunks = block_n // chunk

    def act(z):
        if use_bf16:
            return jnp.tanh(z.astype(jnp.bfloat16)).astype(jnp.float32)
        return jnp.tanh(z)

    def dense(w, b, h_in):
        if use_bf16:
            w = w.astype(jnp.bfloat16)
            h_in = h_in.astype(jnp.bfloat16)
        return jnp.dot(w, h_in, preferred_element_type=jnp.float32) + b

    # Inner lane-chunk loop: bounds the live range of the y1..y4 residual
    # chain (each chunk-activation is H x chunk f32) so nothing spills.
    def chunk_body(c, carry):
        off = pl.multiple_of(c * chunk, chunk)          # aligned lane offset
        x = x_ref[:, pl.ds(off, chunk)]                 # (D_in, chunk)

        # ---- layer 1: K=D_in=2 -> VPU broadcast multiply-adds, no MXU ----
        w1 = w1_ref[...]                                # (H, D_in)
        acc1 = w1[:, 0:1] * x[0:1, :]                   # (H, chunk)
        for d in range(1, d_in):                        # unrolled at trace time
            acc1 = acc1 + w1[:, d:d + 1] * x[d:d + 1, :]
        y1 = act(acc1 + b14_ref[:, 0:1])

        # ---- layers 2-4: HxH matmuls on the MXU + residual skips ----
        y2 = act(dense(w234_ref[0], b14_ref[:, 1:2], y1))
        y3 = act(dense(w234_ref[1], b14_ref[:, 2:3], y2)) + y1
        y4 = act(dense(w234_ref[2], b14_ref[:, 3:4], y3)) + y2

        # ---- layer 5: single (D_out, H) @ (H, chunk) MXU dot ----
        y = jnp.dot(w5_ref[...], y4,
                    preferred_element_type=jnp.float32) + b5_ref[...]
        o_ref[:, pl.ds(off, chunk)] = y.astype(o_ref.dtype)   # lane-dense store
        return carry

    lax.fori_loop(0, n_chunks, chunk_body, 0)


@functools.partial(jax.jit, static_argnames=("block_n", "chunk", "use_bf16"))
def multilayer_net(x, params, block_n=512, chunk=256, use_bf16=False):
    """x: (N, D_in) float32 (PyTorch layout). Returns (N, D_out)."""
    n, d_in = x.shape
    h = params["w1"].shape[0]          # w1: (H, D_in)
    d_out = params["w5"].shape[0]      # w5: (D_out, H)

    # --- tile sizing -------------------------------------------------------
    # Lane-dense tiles; keep the "parallel" grid at >= 2 steps (both v7x TCs
    # busy) whenever the data allows, and make an odd >1 grid even so the
    # megacore split is balanced.  VMEM footprint is tiny, so tiles are only
    # ever capped, never shrunk for VMEM.
    block_n = max(128, (block_n // 128) * 128)
    n_128 = 128 * pl.cdiv(n, 128)
    half = max(128, (n_128 // 2 // 128) * 128)
    block_n = min(block_n, half)
    chunk = max(128, min(chunk, block_n))
    if block_n % chunk != 0:
        chunk = block_n

    num_blocks = pl.cdiv(n, block_n)
    if num_blocks > 1 and num_blocks % 2 == 1:
        num_blocks += 1                # even grid -> balanced 2-TC sharding
    n_pad = num_blocks * block_n

    # Layout plumbing in the wrapper: batch -> lanes, pad to full tiles.
    xt = x.T                           # (D_in, N)
    if n_pad != n:
        xt = jnp.pad(xt, ((0, 0), (0, n_pad - n)))
    # TODO(synk): mask the ragged last block instead of jnp.pad to save one
    # HBM pass over x at very large N.

    # Pack weights/biases -> fewer prologue DMAs / semaphore waits.
    w234 = jnp.stack([params["w2"], params["w3"], params["w4"]])      # (3,H,H)
    b14 = jnp.concatenate([params["b1"], params["b2"],
                           params["b3"], params["b4"]], axis=1)       # (H, 4)

    def full(shape):
        zeros = (0,) * len(shape)
        return pl.BlockSpec(shape, lambda i: zeros)

    in_specs = [
        pl.BlockSpec((d_in, block_n), lambda i: (0, i)),   # x (transposed)
        full((h, d_in)),                                   # w1
        full((h, 4)),                                      # b1..b4 packed
        full((3, h, h)),                                   # w2,w3,w4 packed
        full((d_out, h)),                                  # w5
        full((d_out, 1)),                                  # b5
    ]
    out_spec = pl.BlockSpec((d_out, block_n), lambda i: (0, i))

    flops = 2 * (d_in * h + 3 * h * h + h * d_out) * n_pad
    bytes_accessed = 4 * (d_in * n_pad + d_out * n_pad
                          + h * d_in + 4 * h + 3 * h * h + d_out * h + d_out)

    kernel = functools.partial(mlp_kernel, chunk=chunk, use_bf16=use_bf16)

    yt = pl.pallas_call(
        kernel,
        out_shape=jax.ShapeDtypeStruct((d_out, n_pad), x.dtype),
        grid_spec=pltpu.PrefetchScalarGridSpec(
            num_scalar_prefetch=0,
            grid=(n_pad // block_n,),
            in_specs=in_specs,
            out_specs=out_spec,
        ),
        compiler_params=pltpu.CompilerParams(
            dimension_semantics=("parallel",)),    # megacore-shard batch tiles
        cost_estimate=pl.CostEstimate(
            flops=flops,
            transcendentals=4 * h * n_pad,
            bytes_accessed=bytes_accessed),
    )(xt, params["w1"], b14, w234, params["w5"], params["b5"])

    return yt[:, :n].T                  # (N, D_out)


def init_params(key, d_in, h, d_out):
    """Matches the PyTorch module's normal_ init statistically.

    All weights stored in PyTorch (out, in) layout; biases stored as (dim, 1)
    columns for the batch-on-lanes kernel layout."""
    ks = jax.random.split(key, 10)

    def w(k, fan_out, fan_in, std):
        return jax.random.normal(k, (fan_out, fan_in), jnp.float32) * std

    def b(k, dim):
        return jax.random.normal(k, (dim, 1), jnp.float32)   # std=1, mean=0

    return {
        "w1": w(ks[0], h, d_in, (2.0 / (d_in + h)) ** 0.5),     # (H, D_in)
        "b1": b(ks[1], h),
        "w2": w(ks[2], h, h, (2.0 / (h + h)) ** 0.5),           # (H, H)
        "b2": b(ks[3], h),
        "w3": w(ks[4], h, h, (2.0 / (h + h)) ** 0.5),
        "b3": b(ks[5], h),
        "w4": w(ks[6], h, h, (2.0 / (h + h)) ** 0.5),
        "b4": b(ks[7], h),
        "w5": w(ks[8], d_out, h, (2.0 / (h + d_out)) ** 0.5),   # (D_out, H)
        "b5": b(ks[9], d_out),
    }


def reference_forward(x, p):
    """Pure-JAX reference in the PyTorch (N, D_in) layout."""
    y1 = jnp.tanh(x @ p["w1"].T + p["b1"].T)
    y2 = jnp.tanh(y1 @ p["w2"].T + p["b2"].T)
    y3 = jnp.tanh(y2 @ p["w3"].T + p["b3"].T) + y1
    y4 = jnp.tanh(y3 @ p["w4"].T + p["b4"].T) + y2
    return y4 @ p["w5"].T + p["b5"].T


if __name__ == "__main__":
    # DEM problem: D_in = 2 (x, y coords), H = 32, D_out = 2 (displacements).
    D_IN, H, D_OUT = 2, 32, 2
    N = 1000          # non-multiple batch to exercise the padding path
    BLOCK_N = 512     # -> n_pad = 1024, 2 parallel grid steps (both v7x TCs)

    key = jax.random.PRNGKey(0)
    pkey, xkey = jax.random.split(key)
    params = init_params(pkey, D_IN, H, D_OUT)
    x = jax.random.uniform(xkey, (N, D_IN), jnp.float32)

    y = multilayer_net(x, params, block_n=BLOCK_N)
    y = jax.block_until_ready(y)

    y_ref = reference_forward(x, params)
    assert y.shape == (N, D_OUT)
    err = float(jnp.max(jnp.abs(y - y_ref)))
    assert err < 1e-4, f"mismatch vs reference: max abs err = {err}"

    print("KERNEL_OK")
</pallas_src>

<mosaic_0001>
module attributes {stable_mosaic.version = 11 : i64} {
  func.func @mlp_kernel(%arg0: i32, %arg1: memref<2x512xf32, #tpu.memory_space<vmem>>, %arg2: memref<32x2xf32, #tpu.memory_space<vmem>>, %arg3: memref<32x4xf32, #tpu.memory_space<vmem>>, %arg4: memref<3x32x32xf32, #tpu.memory_space<vmem>>, %arg5: memref<2x32xf32, #tpu.memory_space<vmem>>, %arg6: memref<2x1xf32, #tpu.memory_space<vmem>>, %arg7: memref<2x512xf32, #tpu.memory_space<vmem>>) attributes {dimension_semantics = [#tpu.dimension_semantics<parallel>], iteration_bounds = array<i64: 2>, scalar_prefetch = 0 : i64, scratch_operands = 0 : i64, tpu.core_type = #tpu.core_type<tc>, window_params = [{transform_indices = @transform_0, window_bounds = array<i64: 2, 512>}, {pipeline_mode = #tpu.pipeline_mode<synchronous>, transform_indices = @transform_1, window_bounds = array<i64: 32, 2>}, {pipeline_mode = #tpu.pipeline_mode<synchronous>, transform_indices = @transform_2, window_bounds = array<i64: 32, 4>}, {pipeline_mode = #tpu.pipeline_mode<synchronous>, transform_indices = @transform_3, window_bounds = array<i64: 3, 32, 32>}, {pipeline_mode = #tpu.pipeline_mode<synchronous>, transform_indices = @transform_4, window_bounds = array<i64: 2, 32>}, {pipeline_mode = #tpu.pipeline_mode<synchronous>, transform_indices = @transform_5, window_bounds = array<i64: 2, 1>}, {transform_indices = @transform_6, window_bounds = array<i64: 2, 512>}]} {
    %c0_i32 = arith.constant 0 : i32
    %c2_i32 = arith.constant 2 : i32
    %0 = arith.addi %c0_i32, %c2_i32 : i32
    %c1_i32 = arith.constant 1 : i32
    scf.for %arg8 = %c0_i32 to %0 step %c1_i32  : i32 {
      %c256_i32 = arith.constant 256 : i32
      %1 = arith.muli %arg8, %c256_i32 : i32
      %2 = tpu.assume_multiple %1, 256 : i32
      %c0 = arith.constant 0 : index
      %3 = arith.index_cast %2 : i32 to index
      %4 = vector.load %arg1[%c0, %3] : memref<2x512xf32, #tpu.memory_space<vmem>>, vector<2x256xf32>
      %c0_1 = arith.constant 0 : index
      %c0_2 = arith.constant 0 : index
      %5 = vector.load %arg2[%c0_1, %c0_2] : memref<32x2xf32, #tpu.memory_space<vmem>>, vector<32x2xf32>
      %6 = vector.extract_strided_slice %5 {offsets = [0, 0], sizes = [32, 1], strides = [1, 1]} : vector<32x2xf32> to vector<32x1xf32>
      %7 = vector.extract_strided_slice %4 {offsets = [0, 0], sizes = [1, 256], strides = [1, 1]} : vector<2x256xf32> to vector<1x256xf32>
      %8 = vector.broadcast %6 : vector<32x1xf32> to vector<32x256xf32>
      %9 = vector.broadcast %7 : vector<1x256xf32> to vector<32x256xf32>
      %10 = arith.mulf %8, %9 : vector<32x256xf32>
      %11 = vector.extract_strided_slice %5 {offsets = [0, 1], sizes = [32, 1], strides = [1, 1]} : vector<32x2xf32> to vector<32x1xf32>
      %12 = vector.extract_strided_slice %4 {offsets = [1, 0], sizes = [1, 256], strides = [1, 1]} : vector<2x256xf32> to vector<1x256xf32>
      %13 = vector.broadcast %11 : vector<32x1xf32> to vector<32x256xf32>
      %14 = vector.broadcast %12 : vector<1x256xf32> to vector<32x256xf32>
      %15 = arith.mulf %13, %14 : vector<32x256xf32>
      %16 = arith.addf %10, %15 : vector<32x256xf32>
      %c0_3 = arith.constant 0 : index
      %c0_4 = arith.constant 0 : index
      %17 = vector.load %arg3[%c0_3, %c0_4] : memref<32x4xf32, #tpu.memory_space<vmem>>, vector<32x1xf32>
      %18 = vector.broadcast %17 : vector<32x1xf32> to vector<32x256xf32>
      %19 = arith.addf %16, %18 : vector<32x256xf32>
      %20 = math.tanh %19 : vector<32x256xf32>
      %c0_5 = arith.constant 0 : index
      %c0_6 = arith.constant 0 : index
      %c0_7 = arith.constant 0 : index
      %21 = vector.load %arg4[%c0_5, %c0_6, %c0_7] : memref<3x32x32xf32, #tpu.memory_space<vmem>>, vector<1x32x32xf32>
      %22 = vector.shape_cast %21 : vector<1x32x32xf32> to vector<32x32xf32>
      %c0_8 = arith.constant 0 : index
      %c1 = arith.constant 1 : index
      %23 = vector.load %arg3[%c0_8, %c1] : memref<32x4xf32, #tpu.memory_space<vmem>>, vector<32x1xf32>
      %cst = arith.constant dense<0.000000e+00> : vector<32x256xf32>
      %24 = tpu.matmul %22, %20, %cst {dimension_numbers = #tpu.dot_dimension_numbers<[1], [0], [0], [1], [0, 0, 1, 1], [], []>} : vector<32x32xf32>, vector<32x256xf32>, vector<32x256xf32> -> vector<32x256xf32>
      %25 = vector.broadcast %23 : vector<32x1xf32> to vector<32x256xf32>
      %26 = arith.addf %24, %25 : vector<32x256xf32>
      %27 = math.tanh %26 : vector<32x256xf32>
      %c1_9 = arith.constant 1 : index
      %c0_10 = arith.constant 0 : index
      %c0_11 = arith.constant 0 : index
      %28 = vector.load %arg4[%c1_9, %c0_10, %c0_11] : memref<3x32x32xf32, #tpu.memory_space<vmem>>, vector<1x32x32xf32>
      %29 = vector.shape_cast %28 : vector<1x32x32xf32> to vector<32x32xf32>
      %c0_12 = arith.constant 0 : index
      %c2 = arith.constant 2 : index
      %30 = vector.load %arg3[%c0_12, %c2] : memref<32x4xf32, #tpu.memory_space<vmem>>, vector<32x1xf32>
      %cst_13 = arith.constant dense<0.000000e+00> : vector<32x256xf32>
      %31 = tpu.matmul %29, %27, %cst_13 {dimension_numbers = #tpu.dot_dimension_numbers<[1], [0], [0], [1], [0, 0, 1, 1], [], []>} : vector<32x32xf32>, vector<32x256xf32>, vector<32x256xf32> -> vector<32x256xf32>
      %32 = vector.broadcast %30 : vector<32x1xf32> to vector<32x256xf32>
      %33 = arith.addf %31, %32 : vector<32x256xf32>
      %34 = math.tanh %33 : vector<32x256xf32>
      %35 = arith.addf %34, %20 : vector<32x256xf32>
      %c2_14 = arith.constant 2 : index
      %c0_15 = arith.constant 0 : index
      %c0_16 = arith.constant 0 : index
      %36 = vector.load %arg4[%c2_14, %c0_15, %c0_16] : memref<3x32x32xf32, #tpu.memory_space<vmem>>, vector<1x32x32xf32>
      %37 = vector.shape_cast %36 : vector<1x32x32xf32> to vector<32x32xf32>
      %c0_17 = arith.constant 0 : index
      %c3 = arith.constant 3 : index
      %38 = vector.load %arg3[%c0_17, %c3] : memref<32x4xf32, #tpu.memory_space<vmem>>, vector<32x1xf32>
      %cst_18 = arith.constant dense<0.000000e+00> : vector<32x256xf32>
      %39 = tpu.matmul %37, %35, %cst_18 {dimension_numbers = #tpu.dot_dimension_numbers<[1], [0], [0], [1], [0, 0, 1, 1], [], []>} : vector<32x32xf32>, vector<32x256xf32>, vector<32x256xf32> -> vector<32x256xf32>
      %40 = vector.broadcast %38 : vector<32x1xf32> to vector<32x256xf32>
      %41 = arith.addf %39, %40 : vector<32x256xf32>
      %42 = math.tanh %41 : vector<32x256xf32>
      %43 = arith.addf %42, %27 : vector<32x256xf32>
      %c0_19 = arith.constant 0 : index
      %c0_20 = arith.constant 0 : index
      %44 = vector.load %arg5[%c0_19, %c0_20] : memref<2x32xf32, #tpu.memory_space<vmem>>, vector<2x32xf32>
      %cst_21 = arith.constant dense<0.000000e+00> : vector<2x256xf32>
      %45 = tpu.matmul %44, %43, %cst_21 {dimension_numbers = #tpu.dot_dimension_numbers<[1], [0], [0], [1], [0, 0, 1, 1], [], []>} : vector<2x32xf32>, vector<32x256xf32>, vector<2x256xf32> -> vector<2x256xf32>
      %c0_22 = arith.constant 0 : index
      %c0_23 = arith.constant 0 : index
      %46 = vector.load %arg6[%c0_22, %c0_23] : memref<2x1xf32, #tpu.memory_space<vmem>>, vector<2x1xf32>
      %47 = vector.broadcast %46 : vector<2x1xf32> to vector<2x256xf32>
      %48 = arith.addf %45, %47 : vector<2x256xf32>
      %c0_24 = arith.constant 0 : index
      %49 = arith.index_cast %2 : i32 to index
      %50 = vector.load %arg7[%c0_24, %49] : memref<2x512xf32, #tpu.memory_space<vmem>>, vector<2x256xf32>
      tpu.vector_store %arg7[%c0_24, %49], %48 {strides = array<i32>} : memref<2x512xf32, #tpu.memory_space<vmem>>, vector<2x256xf32>,
    }
    %c2_i32_0 = arith.constant 2 : i32
    return
  }
  func.func @transform_0(%arg0: i32) -> (i32, i32) {
    %c0_i32 = arith.constant 0 : i32
    %c0_i32_0 = arith.constant 0 : i32
    return %c0_i32, %arg0 : i32, i32
  }
  func.func @transform_1(%arg0: i32) -> (i32, i32) {
    %c0_i32 = arith.constant 0 : i32
    %c0_i32_0 = arith.constant 0 : i32
    %c0_i32_1 = arith.constant 0 : i32
    return %c0_i32, %c0_i32_0 : i32, i32
  }
  func.func @transform_2(%arg0: i32) -> (i32, i32) {
    %c0_i32 = arith.constant 0 : i32
    %c0_i32_0 = arith.constant 0 : i32
    %c0_i32_1 = arith.constant 0 : i32
    return %c0_i32, %c0_i32_0 : i32, i32
  }
  func.func @transform_3(%arg0: i32) -> (i32, i32, i32) {
    %c0_i32 = arith.constant 0 : i32
    %c0_i32_0 = arith.constant 0 : i32
    %c0_i32_1 = arith.constant 0 : i32
    %c0_i32_2 = arith.constant 0 : i32
    return %c0_i32, %c0_i32_0, %c0_i32_1 : i32, i32, i32
  }
  func.func @transform_4(%arg0: i32) -> (i32, i32) {
    %c0_i32 = arith.constant 0 : i32
    %c0_i32_0 = arith.constant 0 : i32
    %c0_i32_1 = arith.constant 0 : i32
    return %c0_i32, %c0_i32_0 : i32, i32
  }
  func.func @transform_5(%arg0: i32) -> (i32, i32) {
    %c0_i32 = arith.constant 0 : i32
    %c0_i32_0 = arith.constant 0 : i32
    %c0_i32_1 = arith.constant 0 : i32
    return %c0_i32, %c0_i32_0 : i32, i32
  }
  func.func @transform_6(%arg0: i32) -> (i32, i32) {
    %c0_i32 = arith.constant 0 : i32
    %c0_i32_0 = arith.constant 0 : i32
    return %c0_i32, %arg0 : i32, i32
  }
}

</mosaic_0001>

<llo_original>
// kernel: multilayer_net.1
$region0: #{multilayer_net.1}
  #allocation0 [shape = 'u32[]', space=smem, size = 0x4, offset = 0x4, fixed_abs, tag = 'smem constant byte address 0x4 - core index']
  #allocation1 [shape = 'u32[144,128]{1,0:T(1,128)}', space=vmem, size = 0x12000, scoped, tag = 'internal scratch']
  %s0 = inlined_call_operand.vmem [shape: f32[2,1024], index: 0, kind: input, shape index: {}]
  %s1 = inlined_call_operand.vmem [shape: f32[32,2], index: 1, kind: input, shape index: {}]
  %s2 = inlined_call_operand.vmem [shape: f32[32,4], index: 2, kind: input, shape index: {}]
  %s3 = inlined_call_operand.vmem [shape: f32[3,32,32], index: 3, kind: input, shape index: {}]
  %s4 = inlined_call_operand.vmem [shape: f32[2,32], index: 4, kind: input, shape index: {}]
  %s5 = inlined_call_operand.vmem [shape: f32[2,1], index: 5, kind: input, shape index: {}]
  %s6 = inlined_call_operand.vmem [shape: f32[2,1024], index: 6, kind: output, shape index: {}]
  %s7 = sld [smem:[#allocation0]]
  $region64: #{multilayer_net.1} parent=0
    _
  %s9 = ssub.s32 1, %s7
  %s10 = scalar_select 0, %s9, %s7
  loop: start=0, step=1, limit=4
  $region2: #{multilayer_net.1} parent=0 // loop_pre_header
    _
  $region3: #{multilayer_net.1} parent=0 // loop_header
    %s12 = sphi 0, %s16
    %p13 = scmp.ge.s32.totalorder %s12, 4
    %s22 = sphi 0, %s24
    %s25 = sphi 0, %s22
    %s26 = sphi 0, %s25
    %s42 = sphi 0, %s26
    %s46 = sphi 0, %s46
    %s48 = sphi 0, %s46
    %s49 = sphi 0, %s48
    %s63 = sphi 0, %s49
    %s67 = sphi 0, %s67
    %s69 = sphi 0, %s67
    %s70 = sphi 0, %s69
    %s84 = sphi 0, %s70
    %s88 = sphi 0, %s88
    %s90 = sphi 0, %s88
    %s91 = sphi 0, %s90
    %s105 = sphi 0, %s91
    %s109 = sphi 0, %s109
    %s111 = sphi 0, %s109
    %s112 = sphi 0, %s111
    %s126 = sphi 0, %s112
    %s130 = sphi 0, %s130
    %s132 = sphi 0, %s130
    %s133 = sphi 0, %s132
    %s147 = sphi 0, %s133
    %s153 = sphi 0, %s155
    %s156 = sphi 0, %s153
    %s157 = sphi 0, %s156
    %s173 = sphi 0, %s157
  $region4: #{multilayer_net.1} parent=0 // loop_header_branch
    %15 = sbr.rel (%p13) target = $region8
  $region5: #{multilayer_net.1} parent=0 // loop_body
    %s17 = ssub.s32 %s12, 1
    %s18 = ssub.s32 %s12, 2
    %s19 = sadd.s32 %s12, 1
    %s20 = ssub.s32 %s12, %s19
    %p21 = scmp.eq.s32.totalorder %s20, 0
    %s23 = sadd.s32 %s22, 1
    %s24 = scalar_select %p21, %s22, %s23
    %p27 = pneg %p21
    %p28 = scmp.eq.s32.totalorder %s12, 1
    %p29 = por %p27, %p28
    %p30 = scmp.ne.s32.totalorder %s22, %s25
    %p31 = scmp.eq.s32.totalorder %s12, 0
    %p32 = por %p30, %p31
    %p33 = scmp.ne.s32.totalorder %s22, %s25
    %p34 = scmp.eq.s32.totalorder %s17, 1
    %p35 = por %p33, %p34
    %p36 = scmp.ne.s32.totalorder %s25, %s26
    %p37 = scmp.eq.s32.totalorder %s17, 0
    %p38 = por %p36, %p37
    %p39 = scmp.ne.s32.totalorder %s25, %s26
    %p40 = scmp.eq.s32.totalorder %s18, 1
    %p41 = por %p39, %p40
    %p43 = scmp.ne.s32.totalorder %s26, %s42
    %p44 = scmp.eq.s32.totalorder %s18, 0
    %p45 = por %p43, %p44
    %s47 = sadd.s32 %s46, 1
    %p50 = scmp.eq.s32.totalorder %s12, 1
    %p51 = scmp.ne.s32.totalorder %s46, %s48
    %p52 = scmp.eq.s32.totalorder %s12, 0
    %p53 = por %p51, %p52
    %p54 = scmp.ne.s32.totalorder %s46, %s48
    %p55 = scmp.eq.s32.totalorder %s17, 1
    %p56 = por %p54, %p55
    %p57 = scmp.ne.s32.totalorder %s48, %s49
    %p58 = scmp.eq.s32.totalorder %s17, 0
    %p59 = por %p57, %p58
    %p60 = scmp.ne.s32.totalorder %s48, %s49
    %p61 = scmp.eq.s32.totalorder %s18, 1
    %p62 = por %p60, %p61
    %p64 = scmp.ne.s32.totalorder %s49, %s63
    %p65 = scmp.eq.s32.totalorder %s18, 0
    %p66 = por %p64, %p65
    %s68 = sadd.s32 %s67, 1
    %p71 = scmp.eq.s32.totalorder %s12, 1
    %p72 = scmp.ne.s32.totalorder %s67, %s69
    %p73 = scmp.eq.s32.totalorder %s12, 0
    %p74 = por %p72, %p73
    %p75 = scmp.ne.s32.totalorder %s67, %s69
    %p76 = scmp.eq.s32.totalorder %s17, 1
    %p77 = por %p75, %p76
    %p78 = scmp.ne.s32.totalorder %s69, %s70
    %p79 = scmp.eq.s32.totalorder %s17, 0
    %p80 = por %p78, %p79
    %p81 = scmp.ne.s32.totalorder %s69, %s70
    %p82 = scmp.eq.s32.totalorder %s18, 1
    %p83 = por %p81, %p82
    %p85 = scmp.ne.s32.totalorder %s70, %s84
    %p86 = scmp.eq.s32.totalorder %s18, 0
    %p87 = por %p85, %p86
    %s89 = sadd.s32 %s88, 1
    %p92 = scmp.eq.s32.totalorder %s12, 1
    %p93 = scmp.ne.s32.totalorder %s88, %s90
    %p94 = scmp.eq.s32.totalorder %s12, 0
    %p95 = por %p93, %p94
    %p96 = scmp.ne.s32.totalorder %s88, %s90
    %p97 = scmp.eq.s32.totalorder %s17, 1
    %p98 = por %p96, %p97
    %p99 = scmp.ne.s32.totalorder %s90, %s91
    %p100 = scmp.eq.s32.totalorder %s17, 0
    %p101 = por %p99, %p100
    %p102 = scmp.ne.s32.totalorder %s90, %s91
    %p103 = scmp.eq.s32.totalorder %s18, 1
    %p104 = por %p102, %p103
    %p106 = scmp.ne.s32.totalorder %s91, %s105
    %p107 = scmp.eq.s32.totalorder %s18, 0
    %p108 = por %p106, %p107
    %s110 = sadd.s32 %s109, 1
    %p113 = scmp.eq.s32.totalorder %s12, 1
    %p114 = scmp.ne.s32.totalorder %s109, %s111
    %p115 = scmp.eq.s32.totalorder %s12, 0
    %p116 = por %p114, %p115
    %p117 = scmp.ne.s32.totalorder %s109, %s111
    %p118 = scmp.eq.s32.totalorder %s17, 1
    %p119 = por %p117, %p118
    %p120 = scmp.ne.s32.totalorder %s111, %s112
    %p121 = scmp.eq.s32.totalorder %s17, 0
    %p122 = por %p120, %p121
    %p123 = scmp.ne.s32.totalorder %s111, %s112
    %p124 = scmp.eq.s32.totalorder %s18, 1
    %p125 = por %p123, %p124
    %p127 = scmp.ne.s32.totalorder %s112, %s126
    %p128 = scmp.eq.s32.totalorder %s18, 0
    %p129 = por %p127, %p128
    %s131 = sadd.s32 %s130, 1
    %p134 = scmp.eq.s32.totalorder %s12, 1
    %p135 = scmp.ne.s32.totalorder %s130, %s132
    %p136 = scmp.eq.s32.totalorder %s12, 0
    %p137 = por %p135, %p136
    %p138 = scmp.ne.s32.totalorder %s130, %s132
    %p139 = scmp.eq.s32.totalorder %s17, 1
    %p140 = por %p138, %p139
    %p141 = scmp.ne.s32.totalorder %s132, %s133
    %p142 = scmp.eq.s32.totalorder %s17, 0
    %p143 = por %p141, %p142
    %p144 = scmp.ne.s32.totalorder %s132, %s133
    %p145 = scmp.eq.s32.totalorder %s18, 1
    %p146 = por %p144, %p145
    %p148 = scmp.ne.s32.totalorder %s133, %s147
    %p149 = scmp.eq.s32.totalorder %s18, 0
    %p150 = por %p148, %p149
    %s151 = ssub.s32 %s12, %s19
    %p152 = scmp.eq.s32.totalorder %s151, 0
    %s154 = sadd.s32 %s153, 1
    %s155 = scalar_select %p152, %s153, %s154
    %p158 = pneg %p152
    %p159 = scmp.eq.s32.totalorder %s12, 1
    %p160 = por %p158, %p159
    %p161 = scmp.ne.s32.totalorder %s153, %s156
    %p162 = scmp.eq.s32.totalorder %s12, 0
    %p163 = por %p161, %p162
    %p164 = scmp.ne.s32.totalorder %s153, %s156
    %p165 = scmp.eq.s32.totalorder %s17, 1
    %p166 = por %p164, %p165
    %p167 = scmp.ne.s32.totalorder %s156, %s157
    %p168 = scmp.eq.s32.totalorder %s17, 0
    %p169 = por %p167, %p168
    %p170 = scmp.ne.s32.totalorder %s156, %s157
    %p171 = scmp.eq.s32.totalorder %s18, 1
    %p172 = por %p170, %p171
    %p174 = scmp.ne.s32.totalorder %s157, %s173
    %p175 = scmp.eq.s32.totalorder %s18, 0
    %p176 = por %p174, %p175
    %p177 = scmp.le.s32.totalorder 1, %s12
    %p178 = scmp.lt.s32.totalorder %s12, 3
    %p179 = pnand %p177, %p178
    %p180 = pneg %p179
    // Predicated region
    $region9: #{multilayer_net.1} parent=5 // pred_check
      _
    $region10: #{multilayer_net.1} parent=5 // pred_check_branch
      %182 = sbr.rel (%p179) target = $region12
    $region11: #{multilayer_net.1} parent=5 // pred_region
      %s183 = ssub.s32 %s12, 1
      // Predicated region
      $region13: #{multilayer_net.1} parent=11 // pred_check
        %p184 = pneg %p59
      $region14: #{multilayer_net.1} parent=11 // pred_check_branch
        %186 = sbr.rel (%p184) target = $region16
      $region15: #{multilayer_net.1} parent=11 // pred_region
        _
      $region16: #{multilayer_net.1} parent=11 // pred_fallthru
        _
      // Predicated region
      $region17: #{multilayer_net.1} parent=11 // pred_check
        %p187 = pneg %p80
      $region18: #{multilayer_net.1} parent=11 // pred_check_branch
        %189 = sbr.rel (%p187) target = $region20
      $region19: #{multilayer_net.1} parent=11 // pred_region
        _
      $region20: #{multilayer_net.1} parent=11 // pred_fallthru
        _
      // Predicated region
      $region21: #{multilayer_net.1} parent=11 // pred_check
        %p190 = pneg %p101
      $region22: #{multilayer_net.1} parent=11 // pred_check_branch
        %192 = sbr.rel (%p190) target = $region24
      $region23: #{multilayer_net.1} parent=11 // pred_region
        _
      $region24: #{multilayer_net.1} parent=11 // pred_fallthru
        _
      // Predicated region
      $region25: #{multilayer_net.1} parent=11 // pred_check
        %p193 = pneg %p122
      $region26: #{multilayer_net.1} parent=11 // pred_check_branch
        %195 = sbr.rel (%p193) target = $region28
      $region27: #{multilayer_net.1} parent=11 // pred_region
        _
      $region28: #{multilayer_net.1} parent=11 // pred_fallthru
        _
      // Predicated region
      $region29: #{multilayer_net.1} parent=11 // pred_check
        %p196 = pneg %p143
      $region30: #{multilayer_net.1} parent=11 // pred_check_branch
        %198 = sbr.rel (%p196) target = $region32
      $region31: #{multilayer_net.1} parent=11 // pred_region
        _
      $region32: #{multilayer_net.1} parent=11 // pred_fallthru
        _
    $region12: #{multilayer_net.1} parent=5 // pred_fallthru
      _
    %p199 = scmp.lt.s32.totalorder %s12, 2
    // Predicated region
    $region33: #{multilayer_net.1} parent=5 // pred_check
      %p200 = pneg %p199
    $region34: #{multilayer_net.1} parent=5 // pred_check_branch
      %202 = sbr.rel (%p200) target = $region36
    $region35: #{multilayer_net.1} parent=5 // pred_region
      // Predicated region
      $region37: #{multilayer_net.1} parent=35 // pred_check
        %p203 = pneg %p32
      $region38: #{multilayer_net.1} parent=35 // pred_check_branch
        %205 = sbr.rel (%p203) target = $region40
      $region39: #{multilayer_net.1} parent=35 // pred_region
        %s206 = smul.u32 4, %s12
        %p207 = scmp.lt.s32.totalorder %s206, 7
        %s208 = scalar_select %p207, %s206, 7
        %s209 = smul.addr %s208, 2
        %s210 = scalar_lea.vmem %s0, %s209
        %s211 = smul.u32 4, %s12
      $region40: #{multilayer_net.1} parent=35 // pred_fallthru
        _
    $region36: #{multilayer_net.1} parent=5 // pred_fallthru
      _
    %p212 = scmp.le.s32.totalorder 1, %s12
    %p213 = scmp.lt.s32.totalorder %s12, 3
    %p214 = pnand %p212, %p213
    %p215 = pneg %p214
    // Predicated region
    $region41: #{multilayer_net.1} parent=5 // pred_check
      _
    $region42: #{multilayer_net.1} parent=5 // pred_check_branch
      %217 = sbr.rel (%p214) target = $region44
    $region43: #{multilayer_net.1} parent=5 // pred_region
      %s218 = ssub.s32 %s12, 1
      %s219 = smul.u32 4, %s17
      %p220 = scmp.lt.s32.totalorder %s219, 7
      %s221 = scalar_select %p220, %s219, 7
      %s222 = smul.addr %s221, 2
      %s223 = scalar_lea.vmem %s0, %s222
      %p224 = pneg %p38
      %p225 = pneg %p35
      %p226 = pneg %p59
      %p227 = pneg %p56
      %p228 = pneg %p80
      %p229 = pneg %p77
      %p230 = pneg %p101
      %p231 = pneg %p98
      %p232 = pneg %p122
      %p233 = pneg %p119
      %p234 = pneg %p143
      %p235 = pneg %p140
      %p236 = pneg %p169
      %p237 = pneg %p166
      %s238 = smul.u32 4, %s17
      %p239 = scmp.lt.s32.totalorder %s238, 7
      %s240 = scalar_select %p239, %s238, 7
      %s241 = smul.addr %s240, 2
      %s242 = scalar_lea.vmem %s6, %s241
      %s243 = smul.u32 4, %s17
      %p244 = scmp.lt.s32.totalorder %s243, 7
      %s245 = scalar_select %p244, %s243, 7
      %s246 = smul.addr %s245, 2
      %s247 = scalar_lea.vmem %s0, %s246
      %s248 = smul.u32 4, %s17
      %s249 = smul.u32 4, %s17
      %p250 = scmp.lt.s32.totalorder %s249, 7
      %s251 = scalar_select %p250, %s249, 7
      %s252 = smul.addr %s251, 2
      %s253 = scalar_lea.vmem %s6, %s252
      %s254 = smul.u32 4, %s17
      loop: start=0, step=1, limit=2
      $region45: #{multilayer_net.1} parent=43 // loop_pre_header
        _
      $region46: #{multilayer_net.1} parent=43 // loop_header
        %s256 = sphi 0, %s260
        %p257 = scmp.ge.s32.totalorder %s256, 2
      $region47: #{multilayer_net.1} parent=43 // loop_header_branch
        %259 = sbr.rel (%p257) target = $region51
      $region48: #{multilayer_net.1} parent=43 // loop_body
        %s261 = smul.u32 %s256, 256
        %s262 = sshra.s32 %s261, 7
        %s263 = sand.u32 %s261, 127
        %s264 = smul.addr %s262, 2
        %s265 = scalar_lea.vmem %s247, %s264
        %v266 = vld [vmem:[%s265] sm:$0xf]
        %v267 = vld [vmem:[%s1] sm:$0xff]
        %v268 = vld [vmem:[%s1 + $0x8] sm:$0xff]
        %v269 = vld [vmem:[%s1 + $0x10] sm:$0xff]
        %v270 = vld [vmem:[%s1 + $0x18] sm:$0xff]
        %272 = vset.pattern.permute.xlu0 0
        %273 = vperm.xlu0 %272, %v267
        %v274 = vpop.permute.xlu0 %273
        %277 = vset.pattern.permute.xlu0 0
        %278 = vperm.xlu0 %277, %v268
        %v279 = vpop.permute.xlu0 %278
        %282 = vset.pattern.permute.xlu0 0
        %283 = vperm.xlu0 %282, %v269
        %v284 = vpop.permute.xlu0 %283
        %287 = vset.pattern.permute.xlu0 0
        %288 = vperm.xlu0 %287, %v270
        %v289 = vpop.permute.xlu0 %288
        %v292 = vlaneseq
        %v293 = vshrl.u32 %v292, 7
        %v294 = vsub.s32 0, %v293
        %v295 = vrot.slane %v266, %v294
        %v296 = vlaneseq
        %v297 = vshrl.u32 %v296, 7
        %v298 = vsub.s32 2, %v297
        %v299 = vrot.slane %v266, %v298
        %v302 = vlaneseq
        %v303 = vshrl.u32 %v302, 7
        %v304 = vsub.s32 0, %v303
        %v305 = vrot.slane %v295, %v304
        %v306 = vlaneseq
        %v307 = vshrl.u32 %v306, 7
        %v308 = vsub.s32 0, %v307
        %v309 = vrot.slane %v299, %v308
        %v310 = vmul.f32 %v274, %v305
        %v311 = vmul.f32 %v274, %v309
        %v312 = vmul.f32 %v279, %v305
        %v313 = vmul.f32 %v279, %v309
        %v314 = vmul.f32 %v284, %v305
        %v315 = vmul.f32 %v284, %v309
        %v316 = vmul.f32 %v289, %v305
        %v317 = vmul.f32 %v289, %v309
        %318 = vset.pattern.permute.xlu0 1
        %319 = vperm.xlu0 %318, %v267
        %v320 = vpop.permute.xlu0 %319
        %322 = vset.pattern.permute.xlu0 1
        %323 = vperm.xlu0 %322, %v268
        %v324 = vpop.permute.xlu0 %323
        %326 = vset.pattern.permute.xlu0 1
        %327 = vperm.xlu0 %326, %v269
        %v328 = vpop.permute.xlu0 %327
        %330 = vset.pattern.permute.xlu0 1
        %331 = vperm.xlu0 %330, %v270
        %v332 = vpop.permute.xlu0 %331
        %v334 = vlaneseq
        %v335 = vshrl.u32 %v334, 7
        %v336 = vsub.s32 1, %v335
        %v337 = vrot.slane %v266, %v336
        %v338 = vlaneseq
        %v339 = vshrl.u32 %v338, 7
        %v340 = vsub.s32 3, %v339
        %v341 = vrot.slane %v266, %v340
        %v344 = vlaneseq
        %v345 = vshrl.u32 %v344, 7
        %v346 = vsub.s32 1, %v345
        %v347 = vrot.slane %v337, %v346
        %v348 = vlaneseq
        %v349 = vshrl.u32 %v348, 7
        %v350 = vsub.s32 1, %v349
        %v351 = vrot.slane %v341, %v350
        %v352 = vmul.f32 %v320, %v347
        %v353 = vmul.f32 %v320, %v351
        %v354 = vmul.f32 %v324, %v347
        %v355 = vmul.f32 %v324, %v351
        %v356 = vmul.f32 %v328, %v347
        %v357 = vmul.f32 %v328, %v351
        %v358 = vmul.f32 %v332, %v347
        %v359 = vmul.f32 %v332, %v351
        %v360 = vadd.f32 %v310, %v352
        %v361 = vadd.f32 %v311, %v353
        %v362 = vadd.f32 %v312, %v354
        %v363 = vadd.f32 %v313, %v355
        %v364 = vadd.f32 %v314, %v356
        %v365 = vadd.f32 %v315, %v357
        %v366 = vadd.f32 %v316, %v358
        %v367 = vadd.f32 %v317, %v359
        %v368 = vld [vmem:[%s2] sm:$0xff]
        %v369 = vld [vmem:[%s2 + $0x8] sm:$0xff]
        %v370 = vld [vmem:[%s2 + $0x10] sm:$0xff]
        %v371 = vld [vmem:[%s2 + $0x18] sm:$0xff]
        %373 = vset.pattern.permute.xlu0 0
        %374 = vperm.xlu0 %373, %v368
        %v375 = vpop.permute.xlu0 %374
        %378 = vset.pattern.permute.xlu0 0
        %379 = vperm.xlu0 %378, %v369
        %v380 = vpop.permute.xlu0 %379
        %383 = vset.pattern.permute.xlu0 0
        %384 = vperm.xlu0 %383, %v370
        %v385 = vpop.permute.xlu0 %384
        %388 = vset.pattern.permute.xlu0 0
        %389 = vperm.xlu0 %388, %v371
        %v390 = vpop.permute.xlu0 %389
        %v392 = vadd.f32 %v360, %v375
        %v393 = vadd.f32 %v361, %v375
        %v394 = vadd.f32 %v362, %v380
        %v395 = vadd.f32 %v363, %v380
        %v396 = vadd.f32 %v364, %v385
        %v397 = vadd.f32 %v365, %v385
        %v398 = vadd.f32 %v366, %v390
        %v399 = vadd.f32 %v367, %v390
        %v400 = vtanh.pop %v392
        %v401 = vtanh.pop %v393
        %v402 = vtanh.pop %v394
        %v403 = vtanh.pop %v395
        %v404 = vtanh.pop %v396
        %v405 = vtanh.pop %v397
        %v406 = vtanh.pop %v398
        %v407 = vtanh.pop %v399
        %v408 = vld [vmem:[%s3] sm:$0xff]
        %v409 = vld [vmem:[%s3 + $0x8] sm:$0xff]
        %v410 = vld [vmem:[%s3 + $0x10] sm:$0xff]
        %v411 = vld [vmem:[%s3 + $0x18] sm:$0xff]
        %412 = vset.pattern.permute.xlu0 1
        %413 = vperm.xlu0 %412, %v368
        %v414 = vpop.permute.xlu0 %413
        %416 = vset.pattern.permute.xlu0 1
        %417 = vperm.xlu0 %416, %v369
        %v418 = vpop.permute.xlu0 %417
        %420 = vset.pattern.permute.xlu0 1
        %421 = vperm.xlu0 %420, %v370
        %v422 = vpop.permute.xlu0 %421
        %424 = vset.pattern.permute.xlu0 1
        %425 = vperm.xlu0 %424, %v371
        %v426 = vpop.permute.xlu0 %425
        %vm428 = vcmask 261120
        %v430 = vsel %vm428, %v408, 0
        %v433 = vsel %vm428, %v409, 0
        %v436 = vsel %vm428, %v410, 0
        %v439 = vsel %vm428, %v411, 0
        %441 = vmatprep.subr.mxu0 0.0
        %442 = vmatpush1.msra.mxu0 0.0
        %443 = vmatprep.subr.mxu0 0.0
        %444 = vmatpush1.msra.mxu0 0.0
        %445 = vmatprep.subr.mxu0 0.0
        %446 = vmatpush1.msra.mxu0 0.0
        %447 = vmatprep.subr.mxu0 0.0
        %448 = vmatpush1.msra.mxu0 0.0
        %449 = vmatprep.subr.mxu0 0.0
        %450 = vmatpush1.msra.mxu0 0.0
        %451 = vmatprep.subr.mxu0 0.0
        %452 = vmatpush1.msra.mxu0 0.0
        %453 = vmatprep.subr.mxu0 0.0
        %454 = vmatpush1.msra.mxu0 0.0
        %455 = vmatprep.subr.mxu0 0.0
        %456 = vmatpush1.msra.mxu0 0.0
        %457 = vmatprep.subr.mxu0 0.0
        %458 = vmatpush1.msra.mxu0 0.0
        %459 = vmatprep.subr.mxu0 0.0
        %460 = vmatpush1.msra.mxu0 0.0
        %461 = vmatprep.subr.mxu0 0.0
        %462 = vmatpush1.msra.mxu0 0.0
        %463 = vmatprep.subr.mxu0 0.0
        %464 = vmatpush1.msra.mxu0 0.0
        %465 = vmatprep.subr.mxu0 %v407
        %466 = vmatpush1.msra.mxu0 %v406
        %467 = vmatprep.subr.mxu0 %v405
        %468 = vmatpush1.msra.mxu0 %v404
        %469 = vmatprep.subr.mxu0 %v403
        %470 = vmatpush1.msra.mxu0 %v402
        %471 = vmatprep.subr.mxu0 %v401
        %472 = vmatpush1.msra.mxu0 %v400
        %473 = vmatprep.subr.mxu0 0.0
        %474 = vmatpush2.msra.mxu0 0.0
        %475 = vmatprep.subr.mxu0 0.0
        %476 = vmatpush2.msra.mxu0 0.0
        %477 = vmatprep.subr.mxu0 0.0
        %478 = vmatpush2.msra.mxu0 0.0
        %479 = vmatprep.subr.mxu0 0.0
        %480 = vmatpush2.msra.mxu0 0.0
        %481 = vmatprep.subr.mxu0 0.0
        %482 = vmatpush2.msra.mxu0 0.0
        %483 = vmatprep.subr.mxu0 0.0
        %484 = vmatpush2.msra.mxu0 0.0
        %485 = vmatprep.subr.mxu0 0.0
        %486 = vmatpush2.msra.mxu0 0.0
        %487 = vmatprep.subr.mxu0 0.0
        %488 = vmatpush2.msra.mxu0 0.0
        %489 = vmatprep.subr.mxu0 0.0
        %490 = vmatpush2.msra.mxu0 0.0
        %491 = vmatprep.subr.mxu0 0.0
        %492 = vmatpush2.msra.mxu0 0.0
        %493 = vmatprep.subr.mxu0 0.0
        %494 = vmatpush2.msra.mxu0 0.0
        %495 = vmatprep.subr.mxu0 0.0
        %496 = vmatpush2.msra.mxu0 0.0
        %497 = vmatprep.subr.mxu0 0.0
        %498 = vmatpush2.msra.mxu0 0.0
        %499 = vmatprep.subr.mxu0 0.0
        %500 = vmatpush2.msra.mxu0 0.0
        %501 = vmatprep.subr.mxu0 0.0
        %502 = vmatpush2.msra.mxu0 0.0
        %503 = vmatprep.subr.mxu0 0.0
        %504 = vmatpush2.msra.mxu0 0.0
        %505 = vmatprep.mubr.f32.mxu0 0.0
        %506 = vmatmul.mubr.f32.gmra.mxu0 %v430
        %v507 = vpop.f32.mrf.mxu0
        %v508 = vadd.f32 %v414, %v507
        %v509 = vpop.f32.mrf.mxu0
        %v510 = vadd.f32 %v414, %v509
        %511 = vmatprep.mubr.f32.mxu0 0.0
        %512 = vmatmul.mubr.f32.gmra.mxu0 %v433
        %v513 = vpop.f32.mrf.mxu0
        %v514 = vadd.f32 %v418, %v513
        %v515 = vpop.f32.mrf.mxu0
        %v516 = vadd.f32 %v418, %v515
        %517 = vmatprep.mubr.f32.mxu0 0.0
        %518 = vmatmul.mubr.f32.gmra.mxu0 %v436
        %v519 = vpop.f32.mrf.mxu0
        %v520 = vadd.f32 %v422, %v519
        %v521 = vpop.f32.mrf.mxu0
        %v522 = vadd.f32 %v422, %v521
        %523 = vmatprep.mubr.f32.mxu0 0.0
        %524 = vmatmul.mubr.f32.gmra.mxu0 %v439
        %v525 = vpop.f32.mrf.mxu0
        %v526 = vadd.f32 %v426, %v525
        %v527 = vpop.f32.mrf.mxu0
        %v528 = vadd.f32 %v426, %v527
        %529 = vdwg.mxu0
        %v530 = vtanh.pop %v508
        %v531 = vtanh.pop %v510
        %v532 = vtanh.pop %v514
        %v533 = vtanh.pop %v516
        %v534 = vtanh.pop %v520
        %v535 = vtanh.pop %v522
        %v536 = vtanh.pop %v526
        %v537 = vtanh.pop %v528
        %s538 = scalar_lea.vmem %s3, 32
        %v539 = vld [vmem:[%s538] sm:$0xff]
        %v540 = vld [vmem:[%s538 + $0x8] sm:$0xff]
        %v541 = vld [vmem:[%s538 + $0x10] sm:$0xff]
        %v542 = vld [vmem:[%s538 + $0x18] sm:$0xff]
        %543 = vset.pattern.permute.xlu0 2
        %544 = vperm.xlu0 %543, %v368
        %v545 = vpop.permute.xlu0 %544
        %547 = vset.pattern.permute.xlu0 2
        %548 = vperm.xlu0 %547, %v369
        %v549 = vpop.permute.xlu0 %548
        %551 = vset.pattern.permute.xlu0 2
        %552 = vperm.xlu0 %551, %v370
        %v553 = vpop.permute.xlu0 %552
        %555 = vset.pattern.permute.xlu0 2
        %556 = vperm.xlu0 %555, %v371
        %v557 = vpop.permute.xlu0 %556
        %v560 = vsel %vm428, %v539, 0
        %v563 = vsel %vm428, %v540, 0
        %v566 = vsel %vm428, %v541, 0
        %v569 = vsel %vm428, %v542, 0
        %571 = vmatprep.subr.mxu0 0.0
        %572 = vmatpush1.msra.mxu0 0.0
        %573 = vmatprep.subr.mxu0 0.0
        %574 = vmatpush1.msra.mxu0 0.0
        %575 = vmatprep.subr.mxu0 0.0
        %576 = vmatpush1.msra.mxu0 0.0
        %577 = vmatprep.subr.mxu0 0.0
        %578 = vmatpush1.msra.mxu0 0.0
        %579 = vmatprep.subr.mxu0 0.0
        %580 = vmatpush1.msra.mxu0 0.0
        %581 = vmatprep.subr.mxu0 0.0
        %582 = vmatpush1.msra.mxu0 0.0
        %583 = vmatprep.subr.mxu0 0.0
        %584 = vmatpush1.msra.mxu0 0.0
        %585 = vmatprep.subr.mxu0 0.0
        %586 = vmatpush1.msra.mxu0 0.0
        %587 = vmatprep.subr.mxu0 0.0
        %588 = vmatpush1.msra.mxu0 0.0
        %589 = vmatprep.subr.mxu0 0.0
        %590 = vmatpush1.msra.mxu0 0.0
        %591 = vmatprep.subr.mxu0 0.0
        %592 = vmatpush1.msra.mxu0 0.0
        %593 = vmatprep.subr.mxu0 0.0
        %594 = vmatpush1.msra.mxu0 0.0
        %595 = vmatprep.subr.mxu0 %v537
        %596 = vmatpush1.msra.mxu0 %v536
        %597 = vmatprep.subr.mxu0 %v535
        %598 = vmatpush1.msra.mxu0 %v534
        %599 = vmatprep.subr.mxu0 %v533
        %600 = vmatpush1.msra.mxu0 %v532
        %601 = vmatprep.subr.mxu0 %v531
        %602 = vmatpush1.msra.mxu0 %v530
        %603 = vmatprep.subr.mxu0 0.0
        %604 = vmatpush2.msra.mxu0 0.0
        %605 = vmatprep.subr.mxu0 0.0
        %606 = vmatpush2.msra.mxu0 0.0
        %607 = vmatprep.subr.mxu0 0.0
        %608 = vmatpush2.msra.mxu0 0.0
        %609 = vmatprep.subr.mxu0 0.0
        %610 = vmatpush2.msra.mxu0 0.0
        %611 = vmatprep.subr.mxu0 0.0
        %612 = vmatpush2.msra.mxu0 0.0
        %613 = vmatprep.subr.mxu0 0.0
        %614 = vmatpush2.msra.mxu0 0.0
        %615 = vmatprep.subr.mxu0 0.0
        %616 = vmatpush2.msra.mxu0 0.0
        %617 = vmatprep.subr.mxu0 0.0
        %618 = vmatpush2.msra.mxu0 0.0
        %619 = vmatprep.subr.mxu0 0.0
        %620 = vmatpush2.msra.mxu0 0.0
        %621 = vmatprep.subr.mxu0 0.0
        %622 = vmatpush2.msra.mxu0 0.0
        %623 = vmatprep.subr.mxu0 0.0
        %624 = vmatpush2.msra.mxu0 0.0
        %625 = vmatprep.subr.mxu0 0.0
        %626 = vmatpush2.msra.mxu0 0.0
        %627 = vmatprep.subr.mxu0 0.0
        %628 = vmatpush2.msra.mxu0 0.0
        %629 = vmatprep.subr.mxu0 0.0
        %630 = vmatpush2.msra.mxu0 0.0
        %631 = vmatprep.subr.mxu0 0.0
        %632 = vmatpush2.msra.mxu0 0.0
        %633 = vmatprep.subr.mxu0 0.0
        %634 = vmatpush2.msra.mxu0 0.0
        %635 = vmatprep.mubr.f32.mxu0 0.0
        %636 = vmatmul.mubr.f32.gmra.mxu0 %v560
        %v637 = vpop.f32.mrf.mxu0
        %v638 = vadd.f32 %v545, %v637
        %v639 = vpop.f32.mrf.mxu0
        %v640 = vadd.f32 %v545, %v639
        %641 = vmatprep.mubr.f32.mxu0 0.0
        %642 = vmatmul.mubr.f32.gmra.mxu0 %v563
        %v643 = vpop.f32.mrf.mxu0
        %v644 = vadd.f32 %v549, %v643
        %v645 = vpop.f32.mrf.mxu0
        %v646 = vadd.f32 %v549, %v645
        %647 = vmatprep.mubr.f32.mxu0 0.0
        %648 = vmatmul.mubr.f32.gmra.mxu0 %v566
        %v649 = vpop.f32.mrf.mxu0
        %v650 = vadd.f32 %v553, %v649
        %v651 = vpop.f32.mrf.mxu0
        %v652 = vadd.f32 %v553, %v651
        %653 = vmatprep.mubr.f32.mxu0 0.0
        %654 = vmatmul.mubr.f32.gmra.mxu0 %v569
        %v655 = vpop.f32.mrf.mxu0
        %v656 = vadd.f32 %v557, %v655
        %v657 = vpop.f32.mrf.mxu0
        %v658 = vadd.f32 %v557, %v657
        %659 = vdwg.mxu0
        %v660 = vtanh.pop %v638
        %v661 = vtanh.pop %v640
        %v662 = vtanh.pop %v644
        %v663 = vtanh.pop %v646
        %v664 = vtanh.pop %v650
        %v665 = vtanh.pop %v652
        %v666 = vtanh.pop %v656
        %v667 = vtanh.pop %v658
        %v668 = vadd.f32 %v660, %v400
        %v669 = vadd.f32 %v661, %v401
        %v670 = vadd.f32 %v662, %v402
        %v671 = vadd.f32 %v663, %v403
        %v672 = vadd.f32 %v664, %v404
        %v673 = vadd.f32 %v665, %v405
        %v674 = vadd.f32 %v666, %v406
        %v675 = vadd.f32 %v667, %v407
        %s676 = scalar_lea.vmem %s3, 64
        %v677 = vld [vmem:[%s676] sm:$0xff]
        %v678 = vld [vmem:[%s676 + $0x8] sm:$0xff]
        %v679 = vld [vmem:[%s676 + $0x10] sm:$0xff]
        %v680 = vld [vmem:[%s676 + $0x18] sm:$0xff]
        %681 = vset.pattern.permute.xlu0 3
        %682 = vperm.xlu0 %681, %v368
        %v683 = vpop.permute.xlu0 %682
        %685 = vset.pattern.permute.xlu0 3
        %686 = vperm.xlu0 %685, %v369
        %v687 = vpop.permute.xlu0 %686
        %689 = vset.pattern.permute.xlu0 3
        %690 = vperm.xlu0 %689, %v370
        %v691 = vpop.permute.xlu0 %690
        %693 = vset.pattern.permute.xlu0 3
        %694 = vperm.xlu0 %693, %v371
        %v695 = vpop.permute.xlu0 %694
        %v698 = vsel %vm428, %v677, 0
        %v701 = vsel %vm428, %v678, 0
        %v704 = vsel %vm428, %v679, 0
        %v707 = vsel %vm428, %v680, 0
        %709 = vmatprep.subr.mxu0 0.0
        %710 = vmatpush1.msra.mxu0 0.0
        %711 = vmatprep.subr.mxu0 0.0
        %712 = vmatpush1.msra.mxu0 0.0
        %713 = vmatprep.subr.mxu0 0.0
        %714 = vmatpush1.msra.mxu0 0.0
        %715 = vmatprep.subr.mxu0 0.0
        %716 = vmatpush1.msra.mxu0 0.0
        %717 = vmatprep.subr.mxu0 0.0
        %718 = vmatpush1.msra.mxu0 0.0
        %719 = vmatprep.subr.mxu0 0.0
        %720 = vmatpush1.msra.mxu0 0.0
        %721 = vmatprep.subr.mxu0 0.0
        %722 = vmatpush1.msra.mxu0 0.0
        %723 = vmatprep.subr.mxu0 0.0
        %724 = vmatpush1.msra.mxu0 0.0
        %725 = vmatprep.subr.mxu0 0.0
        %726 = vmatpush1.msra.mxu0 0.0
        %727 = vmatprep.subr.mxu0 0.0
        %728 = vmatpush1.msra.mxu0 0.0
        %729 = vmatprep.subr.mxu0 0.0
        %730 = vmatpush1.msra.mxu0 0.0
        %731 = vmatprep.subr.mxu0 0.0
        %732 = vmatpush1.msra.mxu0 0.0
        %733 = vmatprep.subr.mxu0 %v675
        %734 = vmatpush1.msra.mxu0 %v674
        %735 = vmatprep.subr.mxu0 %v673
        %736 = vmatpush1.msra.mxu0 %v672
        %737 = vmatprep.subr.mxu0 %v671
        %738 = vmatpush1.msra.mxu0 %v670
        %739 = vmatprep.subr.mxu0 %v669
        %740 = vmatpush1.msra.mxu0 %v668
        %741 = vmatprep.subr.mxu0 0.0
        %742 = vmatpush2.msra.mxu0 0.0
        %743 = vmatprep.subr.mxu0 0.0
        %744 = vmatpush2.msra.mxu0 0.0
        %745 = vmatprep.subr.mxu0 0.0
        %746 = vmatpush2.msra.mxu0 0.0
        %747 = vmatprep.subr.mxu0 0.0
        %748 = vmatpush2.msra.mxu0 0.0
        %749 = vmatprep.subr.mxu0 0.0
        %750 = vmatpush2.msra.mxu0 0.0
        %751 = vmatprep.subr.mxu0 0.0
        %752 = vmatpush2.msra.mxu0 0.0
        %753 = vmatprep.subr.mxu0 0.0
        %754 = vmatpush2.msra.mxu0 0.0
        %755 = vmatprep.subr.mxu0 0.0
        %756 = vmatpush2.msra.mxu0 0.0
        %757 = vmatprep.subr.mxu0 0.0
        %758 = vmatpush2.msra.mxu0 0.0
        %759 = vmatprep.subr.mxu0 0.0
        %760 = vmatpush2.msra.mxu0 0.0
        %761 = vmatprep.subr.mxu0 0.0
        %762 = vmatpush2.msra.mxu0 0.0
        %763 = vmatprep.subr.mxu0 0.0
        %764 = vmatpush2.msra.mxu0 0.0
        %765 = vmatprep.subr.mxu0 0.0
        %766 = vmatpush2.msra.mxu0 0.0
        %767 = vmatprep.subr.mxu0 0.0
        %768 = vmatpush2.msra.mxu0 0.0
        %769 = vmatprep.subr.mxu0 0.0
        %770 = vmatpush2.msra.mxu0 0.0
        %771 = vmatprep.subr.mxu0 0.0
        %772 = vmatpush2.msra.mxu0 0.0
        %773 = vmatprep.mubr.f32.mxu0 0.0
        %774 = vmatmul.mubr.f32.gmra.mxu0 %v698
        %v775 = vpop.f32.mrf.mxu0
        %v776 = vadd.f32 %v683, %v775
        %v777 = vpop.f32.mrf.mxu0
        %v778 = vadd.f32 %v683, %v777
        %779 = vmatprep.mubr.f32.mxu0 0.0
        %780 = vmatmul.mubr.f32.gmra.mxu0 %v701
        %v781 = vpop.f32.mrf.mxu0
        %v782 = vadd.f32 %v687, %v781
        %v783 = vpop.f32.mrf.mxu0
        %v784 = vadd.f32 %v687, %v783
        %785 = vmatprep.mubr.f32.mxu0 0.0
        %786 = vmatmul.mubr.f32.gmra.mxu0 %v704
        %v787 = vpop.f32.mrf.mxu0
        %v788 = vadd.f32 %v691, %v787
        %v789 = vpop.f32.mrf.mxu0
        %v790 = vadd.f32 %v691, %v789
        %791 = vmatprep.mubr.f32.mxu0 0.0
        %792 = vmatmul.mubr.f32.gmra.mxu0 %v707
        %v793 = vpop.f32.mrf.mxu0
        %v794 = vadd.f32 %v695, %v793
        %v795 = vpop.f32.mrf.mxu0
        %v796 = vadd.f32 %v695, %v795
        %797 = vdwg.mxu0
        %v798 = vtanh.pop %v776
        %v799 = vtanh.pop %v778
        %v800 = vtanh.pop %v782
        %v801 = vtanh.pop %v784
        %v802 = vtanh.pop %v788
        %v803 = vtanh.pop %v790
        %v804 = vtanh.pop %v794
        %v805 = vtanh.pop %v796
        %v806 = vadd.f32 %v798, %v530
        %v807 = vadd.f32 %v799, %v531
        %v808 = vadd.f32 %v800, %v532
        %v809 = vadd.f32 %v801, %v533
        %v810 = vadd.f32 %v802, %v534
        %v811 = vadd.f32 %v803, %v535
        %v812 = vadd.f32 %v804, %v536
        %v813 = vadd.f32 %v805, %v537
        %v814 = vld [vmem:[%s4] sm:$0x3]
        %v815 = vld [vmem:[%s5] sm:$0x3]
        %817 = vset.pattern.permute.xlu0 0
        %818 = vperm.xlu0 %817, %v815
        %v819 = vpop.permute.xlu0 %818
        %v822 = vsel %vm428, %v814, 0
        %824 = vmatprep.subr.mxu0 0.0
        %825 = vmatpush1.msra.mxu0 0.0
        %826 = vmatprep.subr.mxu0 0.0
        %827 = vmatpush1.msra.mxu0 0.0
        %828 = vmatprep.subr.mxu0 0.0
        %829 = vmatpush1.msra.mxu0 0.0
        %830 = vmatprep.subr.mxu0 0.0
        %831 = vmatpush1.msra.mxu0 0.0
        %832 = vmatprep.subr.mxu0 0.0
        %833 = vmatpush1.msra.mxu0 0.0
        %834 = vmatprep.subr.mxu0 0.0
        %835 = vmatpush1.msra.mxu0 0.0
        %836 = vmatprep.subr.mxu0 0.0
        %837 = vmatpush1.msra.mxu0 0.0
        %838 = vmatprep.subr.mxu0 0.0
        %839 = vmatpush1.msra.mxu0 0.0
        %840 = vmatprep.subr.mxu0 0.0
        %841 = vmatpush1.msra.mxu0 0.0
        %842 = vmatprep.subr.mxu0 0.0
        %843 = vmatpush1.msra.mxu0 0.0
        %844 = vmatprep.subr.mxu0 0.0
        %845 = vmatpush1.msra.mxu0 0.0
        %846 = vmatprep.subr.mxu0 0.0
        %847 = vmatpush1.msra.mxu0 0.0
        %848 = vmatprep.subr.mxu0 %v813
        %849 = vmatpush1.msra.mxu0 %v812
        %850 = vmatprep.subr.mxu0 %v811
        %851 = vmatpush1.msra.mxu0 %v810
        %852 = vmatprep.subr.mxu0 %v809
        %853 = vmatpush1.msra.mxu0 %v808
        %854 = vmatprep.subr.mxu0 %v807
        %855 = vmatpush1.msra.mxu0 %v806
        %856 = vmatprep.subr.mxu0 0.0
        %857 = vmatpush2.msra.mxu0 0.0
        %858 = vmatprep.subr.mxu0 0.0
        %859 = vmatpush2.msra.mxu0 0.0
        %860 = vmatprep.subr.mxu0 0.0
        %861 = vmatpush2.msra.mxu0 0.0
        %862 = vmatprep.subr.mxu0 0.0
        %863 = vmatpush2.msra.mxu0 0.0
        %864 = vmatprep.subr.mxu0 0.0
        %865 = vmatpush2.msra.mxu0 0.0
        %866 = vmatprep.subr.mxu0 0.0
        %867 = vmatpush2.msra.mxu0 0.0
        %868 = vmatprep.subr.mxu0 0.0
        %869 = vmatpush2.msra.mxu0 0.0
        %870 = vmatprep.subr.mxu0 0.0
        %871 = vmatpush2.msra.mxu0 0.0
        %872 = vmatprep.subr.mxu0 0.0
        %873 = vmatpush2.msra.mxu0 0.0
        %874 = vmatprep.subr.mxu0 0.0
        %875 = vmatpush2.msra.mxu0 0.0
        %876 = vmatprep.subr.mxu0 0.0
        %877 = vmatpush2.msra.mxu0 0.0
        %878 = vmatprep.subr.mxu0 0.0
        %879 = vmatpush2.msra.mxu0 0.0
        %880 = vmatprep.subr.mxu0 0.0
        %881 = vmatpush2.msra.mxu0 0.0
        %882 = vmatprep.subr.mxu0 0.0
        %883 = vmatpush2.msra.mxu0 0.0
        %884 = vmatprep.subr.mxu0 0.0
        %885 = vmatpush2.msra.mxu0 0.0
        %886 = vmatprep.subr.mxu0 0.0
        %887 = vmatpush2.msra.mxu0 0.0
        %888 = vmatprep.mubr.f32.mxu0 0.0
        %889 = vmatmul.mubr.f32.gmra.mxu0 %v822
        %v890 = vpop.f32.mrf.mxu0
        %v891 = vadd.f32 %v819, %v890
        %v892 = vpop.f32.mrf.mxu0
        %v893 = vadd.f32 %v819, %v892
        %894 = vdwg.mxu0
        %v897 = vcombine.low %v891, %v893
        %v899 = vunpack.c.l.s4 1983009808
        %v900 = vunpack.c.0.s8 %v899
        %v901 = vlaneseq
        %v902 = vshrl.u32 %v901, 7
        %v903 = vsub.s32 %v900, %v902
        %v904 = vrot.slane %v897, %v903
        %s906 = smul.addr %s262, 2
        %s907 = scalar_lea.vmem %s253, %s906
        %908 = vst [vmem:[%s907] sm:$0xf] %v904
      $region49: #{multilayer_net.1} parent=43 // loop_footer
        %s260 = sadd.s32 1, %s256
      $region50: #{multilayer_net.1} parent=43 // loop_footer_branch
        %255 = sbr.rel target = $region46
      $region51: #{multilayer_net.1} parent=43 // loop_exit
        _
      %s909 = smul.u32 4, %s17
      %p910 = scmp.lt.s32.totalorder %s909, 7
      %s911 = scalar_select %p910, %s909, 7
      %s912 = smul.addr %s911, 2
      %s913 = scalar_lea.vmem %s6, %s912
      // Predicated region
      $region52: #{multilayer_net.1} parent=43 // pred_check
        %p914 = pneg %p166
      $region53: #{multilayer_net.1} parent=43 // pred_check_branch
        %916 = sbr.rel (%p914) target = $region55
      $region54: #{multilayer_net.1} parent=43 // pred_region
        %s917 = smul.u32 4, %s17
      $region55: #{multilayer_net.1} parent=43 // pred_fallthru
        _
    $region44: #{multilayer_net.1} parent=5 // pred_fallthru
      _
    %p918 = scmp.le.s32.totalorder 2, %s12
    // Predicated region
    $region56: #{multilayer_net.1} parent=5 // pred_check
      %p919 = pneg %p918
    $region57: #{multilayer_net.1} parent=5 // pred_check_branch
      %921 = sbr.rel (%p919) target = $region59
    $region58: #{multilayer_net.1} parent=5 // pred_region
      %s922 = ssub.s32 %s12, 2
      // Predicated region
      $region60: #{multilayer_net.1} parent=58 // pred_check
        %p923 = pneg %p172
      $region61: #{multilayer_net.1} parent=58 // pred_check_branch
        %925 = sbr.rel (%p923) target = $region63
      $region62: #{multilayer_net.1} parent=58 // pred_region
        %s926 = smul.u32 4, %s18
        %p927 = scmp.lt.s32.totalorder %s926, 7
        %s928 = scalar_select %p927, %s926, 7
        %s929 = smul.addr %s928, 2
        %s930 = scalar_lea.vmem %s6, %s929
      $region63: #{multilayer_net.1} parent=58 // pred_fallthru
        _
    $region59: #{multilayer_net.1} parent=5 // pred_fallthru
      _
  $region6: #{multilayer_net.1} parent=0 // loop_footer
    %s16 = sadd.s32 1, %s12
  $region7: #{multilayer_net.1} parent=0 // loop_footer_branch
    %11 = sbr.rel target = $region3
  $region8: #{multilayer_net.1} parent=0 // loop_exit
    _

</llo_original>
